<compile_context>
chip_gen: v6e
topology: v6e:2x2x1
jax: 0.10.0
libtpu: 0.0.40
codegen_flags: <defaults>
</compile_context>

<pallas_src>
import math

import jax
import jax.numpy as jnp
from jax.experimental import pallas as pl
from jax.experimental.pallas import tpu as pltpu


def _round_up(x, m):
    return (x + m - 1) // m * m


# --------------------------------------------------------------------------
# pass 1: GEMM per block, accumulate column sums of y and y^2 (y is discarded)
# --------------------------------------------------------------------------
def _stats_kernel(x_ref, w_ref, s1_ref, s2_ref):
    y = jnp.dot(x_ref[...], w_ref[...], preferred_element_type=jnp.float32)
    s1 = jnp.sum(y, axis=0, keepdims=True)        # (1, KD)
    s2 = jnp.sum(y * y, axis=0, keepdims=True)    # (1, KD)

    @pl.when(pl.program_id(0) == 0)
    def _init():
        s1_ref[...] = s1
        s2_ref[...] = s2

    @pl.when(pl.program_id(0) > 0)
    def _acc():
        s1_ref[...] += s1
        s2_ref[...] += s2


# --------------------------------------------------------------------------
# pass 2: fused GEMM + BatchNorm(scale, shift) + ReLU, fully parallel grid
# --------------------------------------------------------------------------
def _gemm_bn_relu_kernel(x_ref, w_ref, scale_ref, shift_ref, o_ref):
    y = jnp.dot(x_ref[...], w_ref[...], preferred_element_type=jnp.float32)
    o_ref[...] = jnp.maximum(y * scale_ref[...] + shift_ref[...], 0.0)


# --------------------------------------------------------------------------
# wrapper
# --------------------------------------------------------------------------
def upconv2d_s2_forward(x, weight, bias, gamma, beta, eps=1e-5):
    """x: (N, C, H, W) f32. weight: (C, F, 2, 2). Returns (N, F, 2H, 2W) f32.

    `bias` is accepted for API compatibility but never added: train-mode
    BatchNorm subtracts the per-channel batch mean, which cancels it exactly.
    (Not valid for eval-mode running stats.)
    """
    del bias
    N, C, H, W = x.shape
    Cw, F, kh, kw = weight.shape
    assert Cw == C and kh == 2 and kw == 2
    M = N * H * W
    K4 = 4 * F

    gamma = gamma.astype(jnp.float32)
    beta = beta.astype(jnp.float32)

    # ---- generation-aware VMEM budget ----------------------------------------
    try:
        vmem_cap = int(pltpu.get_tpu_info().vmem_capacity_bytes)
    except Exception:
        vmem_cap = 64 * 1024 * 1024          # conservative fallback (v7x-sized)
    vmem_limit = int(min(vmem_cap * 3 // 4, 100 * 1024 * 1024))

    # ---- lane-dense column folding: KD = r * K4 is a multiple of 128 ---------
    r = 128 // math.gcd(K4, 128)             # lcm(K4, 128) / K4
    if r > 1 and r * r * C * K4 * 4 > vmem_limit // 4:
        r = 1                                # kron'd weight would eat VMEM
    KD = r * K4
    CD = r * C

    # ---- tile size: big blocks (amortize ~0.35us/step), fit VMEM -------------
    w_bytes = CD * KD * 4
    budget = max(vmem_limit - w_bytes - (2 << 20), 2 << 20)
    per_row = (CD + KD) * 4                  # one input row + one output row
    tm = min(4096, budget // (2 * per_row), (8 << 20) // (KD * 4))
    tm = max(8, (tm // 8) * 8)

    Mf = _round_up(M, r) // r                # folded row count (unpadded)
    if Mf <= tm:
        tm = _round_up(Mf, 8)
    Mf_pad = _round_up(Mf, tm)
    nblk = Mf_pad // tm

    # ---- GEMM operands (row-major NHWC flatten; zero padding keeps stats exact)
    x_flat = jnp.transpose(x, (0, 2, 3, 1)).astype(jnp.float32).reshape(M, C)
    pad_rows = Mf_pad * r - M
    if pad_rows:
        x_flat = jnp.pad(x_flat, ((0, pad_rows), (0, 0)))
    xm = x_flat.reshape(Mf_pad, CD)

    wm = weight.reshape(C, K4).astype(jnp.float32)
    w_big = jnp.kron(jnp.eye(r, dtype=jnp.float32), wm) if r > 1 else wm  # (CD, KD)

    ch = (jnp.arange(KD) // 4) % F           # output channel of each folded column
    count = 4.0 * M                          # N * 2H * 2W elements per channel

    # ---- pass 1: batch statistics (y never touches HBM) ----------------------
    s1, s2 = pl.pallas_call(
        _stats_kernel,
        out_shape=(jax.ShapeDtypeStruct((1, KD), jnp.float32),
                   jax.ShapeDtypeStruct((1, KD), jnp.float32)),
        grid_spec=pltpu.PrefetchScalarGridSpec(
            num_scalar_prefetch=0,
            grid=(nblk,),
            in_specs=[pl.BlockSpec((tm, CD), lambda i: (i, 0)),
                      pl.BlockSpec((CD, KD), lambda i: (0, 0))],
            out_specs=[pl.BlockSpec((1, KD), lambda i: (0, 0)),
                       pl.BlockSpec((1, KD), lambda i: (0, 0))]),
        compiler_params=pltpu.CompilerParams(
            dimension_semantics=("arbitrary",),
            vmem_limit_bytes=vmem_limit),
    )(xm, w_big)

    # tiny fold-column -> per-channel reduction and BN scale/shift (plain JAX)
    ssum = s1.reshape(r, F, 4).sum(axis=(0, 2))
    ssq = s2.reshape(r, F, 4).sum(axis=(0, 2))
    mean = ssum / count
    # TODO(synk): E[y^2] - mean^2 loses precision when |mean| >> sigma; switch to
    # a centered update of the (tiny) accumulators if that regime ever matters.
    var = jnp.maximum(ssq / count - mean * mean, 0.0)
    scale_c = gamma / jnp.sqrt(var + eps)
    shift_c = beta - mean * scale_c
    scale_fold = scale_c[ch].reshape(1, KD)
    shift_fold = shift_c[ch].reshape(1, KD)

    # ---- pass 2: fused GEMM + BN + ReLU (parallel grid, lane-dense output) ---
    out_f = pl.pallas_call(
        _gemm_bn_relu_kernel,
        out_shape=jax.ShapeDtypeStruct((Mf_pad, KD), jnp.float32),
        grid_spec=pltpu.PrefetchScalarGridSpec(
            num_scalar_prefetch=0,
            grid=(nblk,),
            in_specs=[pl.BlockSpec((tm, CD), lambda i: (i, 0)),
                      pl.BlockSpec((CD, KD), lambda i: (0, 0)),
                      pl.BlockSpec((1, KD), lambda i: (0, 0)),
                      pl.BlockSpec((1, KD), lambda i: (0, 0))],
            out_specs=pl.BlockSpec((tm, KD), lambda i: (i, 0))),
        compiler_params=pltpu.CompilerParams(
            dimension_semantics=("parallel",),
            vmem_limit_bytes=vmem_limit),
    )(xm, w_big, scale_fold, shift_fold)

    # ---- un-pad, un-fold, scatter GEMM columns back to NCHW ------------------
    out_flat = out_f.reshape(Mf_pad * r, K4)[:M]             # (M, 4F)
    o = out_flat.reshape(N, H, W, F, 2, 2)
    o = jnp.transpose(o, (0, 3, 1, 4, 2, 5)).reshape(N, F, 2 * H, 2 * W)
    return o


# --------------------------------------------------------------------------
# pure-JAX reference (ConvTranspose2d(k=2, s=2) + BN(train) + ReLU, with bias)
# --------------------------------------------------------------------------
def _reference(x, weight, bias, gamma, beta, eps=1e-5):
    N, C, H, W = x.shape
    F = weight.shape[1]
    y = jnp.einsum('nchw,cfab->nfhawb', x, weight).reshape(N, F, 2 * H, 2 * W)
    y = y + bias.reshape(1, F, 1, 1)
    mean = y.mean(axis=(0, 2, 3), keepdims=True)
    var = ((y - mean) ** 2).mean(axis=(0, 2, 3), keepdims=True)
    y = (y - mean) / jnp.sqrt(var + eps)
    y = y * gamma.reshape(1, F, 1, 1) + beta.reshape(1, F, 1, 1)
    return jnp.maximum(y, 0.0)


if __name__ == "__main__":
    key = jax.random.PRNGKey(0)

    def run_case(N, C, H, W, F, tol):
        k = jax.random.fold_in(key, N * 1000 + C * 100 + F)
        kx, kw, kb, kg, kbt = jax.random.split(k, 5)
        x = jax.random.normal(kx, (N, C, H, W), dtype=jnp.float32)
        weight = 0.1 * jax.random.normal(kw, (C, F, 2, 2), dtype=jnp.float32)
        bias = 0.1 * jax.random.normal(kb, (F,), dtype=jnp.float32)
        gamma = 1.0 + 0.1 * jax.random.normal(kg, (F,), dtype=jnp.float32)
        beta = 0.1 * jax.random.normal(kbt, (F,), dtype=jnp.float32)

        out = jax.block_until_ready(
            upconv2d_s2_forward(x, weight, bias, gamma, beta))
        assert out.shape == (N, F, 2 * H, 2 * W)
        ref = _reference(x, weight, bias, gamma, beta)
        err = float(jnp.max(jnp.abs(out - ref)))
        assert err < tol, err

    # aligned shapes: K4 = 32 -> r = 4, KD = 128
    run_case(2, 4, 16, 16, 8, 5e-4)
    # awkward shapes: K4 = 24 -> r = 16, KD = 384; M = 35 needs row padding
    run_case(1, 3, 7, 5, 6, 5e-4)

    print("KERNEL_OK")
</pallas_src>

<mosaic_0001>
module attributes {stable_mosaic.version = 11 : i64} {
  func.func @_stats_kernel(%arg0: i32, %arg1: memref<128x16xf32, #tpu.memory_space<vmem>>, %arg2: memref<16x128xf32, #tpu.memory_space<vmem>>, %arg3: memref<1x128xf32, #tpu.memory_space<vmem>>, %arg4: memref<1x128xf32, #tpu.memory_space<vmem>>) attributes {dimension_semantics = [#tpu.dimension_semantics<arbitrary>], iteration_bounds = array<i64: 1>, scalar_prefetch = 0 : i64, scratch_operands = 0 : i64, tpu.core_type = #tpu.core_type<tc>, window_params = [{transform_indices = @transform_0, window_bounds = array<i64: 128, 16>}, {pipeline_mode = #tpu.pipeline_mode<synchronous>, transform_indices = @transform_1, window_bounds = array<i64: 16, 128>}, {pipeline_mode = #tpu.pipeline_mode<synchronous>, transform_indices = @transform_2, window_bounds = array<i64: 1, 128>}, {pipeline_mode = #tpu.pipeline_mode<synchronous>, transform_indices = @transform_3, window_bounds = array<i64: 1, 128>}]} {
    %c0 = arith.constant 0 : index
    %c0_0 = arith.constant 0 : index
    %0 = vector.load %arg1[%c0, %c0_0] : memref<128x16xf32, #tpu.memory_space<vmem>>, vector<128x16xf32>
    %c0_1 = arith.constant 0 : index
    %c0_2 = arith.constant 0 : index
    %1 = vector.load %arg2[%c0_1, %c0_2] : memref<16x128xf32, #tpu.memory_space<vmem>>, vector<16x128xf32>
    %cst = arith.constant dense<0.000000e+00> : vector<128x128xf32>
    %2 = tpu.matmul %0, %1, %cst {dimension_numbers = #tpu.dot_dimension_numbers<[1], [0], [0], [1], [0, 0, 1, 1], [], []>} : vector<128x16xf32>, vector<16x128xf32>, vector<128x128xf32> -> vector<128x128xf32>
    %cst_3 = arith.constant dense<0.000000e+00> : vector<128xf32>
    %3 = vector.multi_reduction <add>, %2, %cst_3 [0] : vector<128x128xf32> to vector<128xf32>
    %4 = vector.shape_cast %3 : vector<128xf32> to vector<1x128xf32>
    %5 = arith.mulf %2, %2 : vector<128x128xf32>
    %cst_4 = arith.constant dense<0.000000e+00> : vector<128xf32>
    %6 = vector.multi_reduction <add>, %5, %cst_4 [0] : vector<128x128xf32> to vector<128xf32>
    %7 = vector.shape_cast %6 : vector<128xf32> to vector<1x128xf32>
    %c0_i32 = arith.constant 0 : i32
    %8 = arith.cmpi eq, %arg0, %c0_i32 : i32
    %9 = arith.extui %8 : i1 to i32
    %c0_i32_5 = arith.constant 0 : i32
    %10 = arith.cmpi ne, %9, %c0_i32_5 : i32
    scf.if %10 {
      %c0_8 = arith.constant 0 : index
      %c0_9 = arith.constant 0 : index
      %14 = vector.load %arg3[%c0_8, %c0_9] : memref<1x128xf32, #tpu.memory_space<vmem>>, vector<1x128xf32>
      tpu.vector_store %arg3[%c0_8, %c0_9], %4 {strides = array<i32>} : memref<1x128xf32, #tpu.memory_space<vmem>>, vector<1x128xf32>,
      %c0_10 = arith.constant 0 : index
      %c0_11 = arith.constant 0 : index
      %15 = vector.load %arg4[%c0_10, %c0_11] : memref<1x128xf32, #tpu.memory_space<vmem>>, vector<1x128xf32>
      tpu.vector_store %arg4[%c0_10, %c0_11], %7 {strides = array<i32>} : memref<1x128xf32, #tpu.memory_space<vmem>>, vector<1x128xf32>,
    } else {
    }
    %c0_i32_6 = arith.constant 0 : i32
    %11 = arith.cmpi sgt, %arg0, %c0_i32_6 : i32
    %12 = arith.extui %11 : i1 to i32
    %c0_i32_7 = arith.constant 0 : i32
    %13 = arith.cmpi ne, %12, %c0_i32_7 : i32
    scf.if %13 {
      %c0_8 = arith.constant 0 : index
      %c0_9 = arith.constant 0 : index
      %14 = vector.load %arg3[%c0_8, %c0_9] : memref<1x128xf32, #tpu.memory_space<vmem>>, vector<1x128xf32>
      %15 = arith.addf %14, %4 : vector<1x128xf32>
      %c0_10 = arith.constant 0 : index
      %c0_11 = arith.constant 0 : index
      %16 = vector.load %arg3[%c0_10, %c0_11] : memref<1x128xf32, #tpu.memory_space<vmem>>, vector<1x128xf32>
      tpu.vector_store %arg3[%c0_10, %c0_11], %15 {strides = array<i32>} : memref<1x128xf32, #tpu.memory_space<vmem>>, vector<1x128xf32>,
      %c0_12 = arith.constant 0 : index
      %c0_13 = arith.constant 0 : index
      %17 = vector.load %arg4[%c0_12, %c0_13] : memref<1x128xf32, #tpu.memory_space<vmem>>, vector<1x128xf32>
      %18 = arith.addf %17, %7 : vector<1x128xf32>
      %c0_14 = arith.constant 0 : index
      %c0_15 = arith.constant 0 : index
      %19 = vector.load %arg4[%c0_14, %c0_15] : memref<1x128xf32, #tpu.memory_space<vmem>>, vector<1x128xf32>
      tpu.vector_store %arg4[%c0_14, %c0_15], %18 {strides = array<i32>} : memref<1x128xf32, #tpu.memory_space<vmem>>, vector<1x128xf32>,
    } else {
    }
    return
  }
  func.func @transform_0(%arg0: i32) -> (i32, i32) {
    %c0_i32 = arith.constant 0 : i32
    %c0_i32_0 = arith.constant 0 : i32
    return %arg0, %c0_i32 : i32, i32
  }
  func.func @transform_1(%arg0: i32) -> (i32, i32) {
    %c0_i32 = arith.constant 0 : i32
    %c0_i32_0 = arith.constant 0 : i32
    %c0_i32_1 = arith.constant 0 : i32
    return %c0_i32, %c0_i32_0 : i32, i32
  }
  func.func @transform_2(%arg0: i32) -> (i32, i32) {
    %c0_i32 = arith.constant 0 : i32
    %c0_i32_0 = arith.constant 0 : i32
    %c0_i32_1 = arith.constant 0 : i32
    return %c0_i32, %c0_i32_0 : i32, i32
  }
  func.func @transform_3(%arg0: i32) -> (i32, i32) {
    %c0_i32 = arith.constant 0 : i32
    %c0_i32_0 = arith.constant 0 : i32
    %c0_i32_1 = arith.constant 0 : i32
    return %c0_i32, %c0_i32_0 : i32, i32
  }
}

</mosaic_0001>

<llo_original>
// kernel: tpu_custom_call.1
$region0: #{tpu_custom_call.1}
  #allocation0 [shape = 'u32[]', space=smem, size = 0x4, offset = 0x4, fixed_abs, tag = 'smem constant byte address 0x4 - core index']
  #allocation1 [shape = 'u32[144,128]{1,0:T(1,128)}', space=vmem, size = 0x12000, scoped, tag = 'internal scratch']
  %s0 = inlined_call_operand.vmem [shape: f32[128,16], index: 0, kind: input, shape index: {}]
  %s1 = inlined_call_operand.vmem [shape: f32[16,128], index: 1, kind: input, shape index: {}]
  %s2 = inlined_call_operand.hbm [shape: f32[1,128], index: 2, kind: output, shape index: {0}]
  %s3 = inlined_call_operand.hbm [shape: f32[1,128], index: 3, kind: output, shape index: {1}]
  %4 = xla_tuple %s2, %s3
  %s5 = sld [smem:[#allocation0]]
  $region34: #{tpu_custom_call.1} parent=0
    _
  %s7 = ssub.s32 1, %s5
  %s8 = scalar_select 0, %s7, %s5
  $region1: #{tpu_custom_call.1} parent=0
    #allocation2 [shape = 'u8[512]{0}', space=vmem, size = 0x400, scoped, tag = 'output window, operand 0, single buffered']
    #allocation3 [shape = 's32[1]{0}', space=sflag, size = 0x4, scoped, tag = 'scoped memory for tpu_custom_call.1']
    #allocation4 [shape = 'u8[512]{0}', space=vmem, size = 0x400, scoped, tag = 'output window, operand 1, single buffered']
    #allocation5 [shape = 's32[1]{0}', space=sflag, size = 0x4, scoped, tag = 'scoped memory for tpu_custom_call.1']
    %9 = vsyncpa [#allocation3], 0
    %10 = vsyncpa [#allocation5], 0
    // Predicated region
    $region2: #{tpu_custom_call.1} parent=1 // pred_check
      _
    $region3: #{tpu_custom_call.1} parent=1 // pred_check_branch
      %12 = sbr.rel (0) target = $region5
    $region4: #{tpu_custom_call.1} parent=1 // pred_region
      _
    $region5: #{tpu_custom_call.1} parent=1 // pred_fallthru
      _
    // Predicated region
    $region6: #{tpu_custom_call.1} parent=1 // pred_check
      _
    $region7: #{tpu_custom_call.1} parent=1 // pred_check_branch
      %14 = sbr.rel (0) target = $region9
    $region8: #{tpu_custom_call.1} parent=1 // pred_region
      _
    $region9: #{tpu_custom_call.1} parent=1 // pred_fallthru
      _
    %v15 = vld [vmem:[%s0] sm:$0xff]
    %v16 = vld [vmem:[%s0 + $0x8] sm:$0xff]
    %v17 = vld [vmem:[%s0 + $0x10] sm:$0xff]
    %v18 = vld [vmem:[%s0 + $0x18] sm:$0xff]
    %v19 = vld [vmem:[%s0 + $0x20] sm:$0xff]
    %v20 = vld [vmem:[%s0 + $0x28] sm:$0xff]
    %v21 = vld [vmem:[%s0 + $0x30] sm:$0xff]
    %v22 = vld [vmem:[%s0 + $0x38] sm:$0xff]
    %v23 = vld [vmem:[%s0 + $0x40] sm:$0xff]
    %v24 = vld [vmem:[%s0 + $0x48] sm:$0xff]
    %v25 = vld [vmem:[%s0 + $0x50] sm:$0xff]
    %v26 = vld [vmem:[%s0 + $0x58] sm:$0xff]
    %v27 = vld [vmem:[%s0 + $0x60] sm:$0xff]
    %v28 = vld [vmem:[%s0 + $0x68] sm:$0xff]
    %v29 = vld [vmem:[%s0 + $0x70] sm:$0xff]
    %v30 = vld [vmem:[%s0 + $0x78] sm:$0xff]
    %v31 = vld [vmem:[%s1] sm:$0xff]
    %v32 = vld [vmem:[%s1 + $0x8] sm:$0xff]
    %vm33 = vcmask 130048
    %v35 = vsel %vm33, %v15, 0
    %v38 = vsel %vm33, %v16, 0
    %v41 = vsel %vm33, %v17, 0
    %v44 = vsel %vm33, %v18, 0
    %v47 = vsel %vm33, %v19, 0
    %v50 = vsel %vm33, %v20, 0
    %v53 = vsel %vm33, %v21, 0
    %v56 = vsel %vm33, %v22, 0
    %v59 = vsel %vm33, %v23, 0
    %v62 = vsel %vm33, %v24, 0
    %v65 = vsel %vm33, %v25, 0
    %v68 = vsel %vm33, %v26, 0
    %v71 = vsel %vm33, %v27, 0
    %v74 = vsel %vm33, %v28, 0
    %v77 = vsel %vm33, %v29, 0
    %v80 = vsel %vm33, %v30, 0
    %82 = vmatprep.subr.mxu0 0.0
    %83 = vmatpush1.msra.mxu0 0.0
    %84 = vmatprep.subr.mxu0 0.0
    %85 = vmatpush1.msra.mxu0 0.0
    %86 = vmatprep.subr.mxu0 0.0
    %87 = vmatpush1.msra.mxu0 0.0
    %88 = vmatprep.subr.mxu0 0.0
    %89 = vmatpush1.msra.mxu0 0.0
    %90 = vmatprep.subr.mxu0 0.0
    %91 = vmatpush1.msra.mxu0 0.0
    %92 = vmatprep.subr.mxu0 0.0
    %93 = vmatpush1.msra.mxu0 0.0
    %94 = vmatprep.subr.mxu0 0.0
    %95 = vmatpush1.msra.mxu0 0.0
    %96 = vmatprep.subr.mxu0 0.0
    %97 = vmatpush1.msra.mxu0 0.0
    %98 = vmatprep.subr.mxu0 0.0
    %99 = vmatpush1.msra.mxu0 0.0
    %100 = vmatprep.subr.mxu0 0.0
    %101 = vmatpush1.msra.mxu0 0.0
    %102 = vmatprep.subr.mxu0 0.0
    %103 = vmatpush1.msra.mxu0 0.0
    %104 = vmatprep.subr.mxu0 0.0
    %105 = vmatpush1.msra.mxu0 0.0
    %106 = vmatprep.subr.mxu0 0.0
    %107 = vmatpush1.msra.mxu0 0.0
    %108 = vmatprep.subr.mxu0 0.0
    %109 = vmatpush1.msra.mxu0 0.0
    %110 = vmatprep.subr.mxu0 0.0
    %111 = vmatpush1.msra.mxu0 %v32
    %112 = vmatprep.subr.mxu0 0.0
    %113 = vmatpush1.msra.mxu0 %v31
    %114 = vmatprep.subr.mxu0 0.0
    %115 = vmatpush2.msra.mxu0 0.0
    %116 = vmatprep.subr.mxu0 0.0
    %117 = vmatpush2.msra.mxu0 0.0
    %118 = vmatprep.subr.mxu0 0.0
    %119 = vmatpush2.msra.mxu0 0.0
    %120 = vmatprep.subr.mxu0 0.0
    %121 = vmatpush2.msra.mxu0 0.0
    %122 = vmatprep.subr.mxu0 0.0
    %123 = vmatpush2.msra.mxu0 0.0
    %124 = vmatprep.subr.mxu0 0.0
    %125 = vmatpush2.msra.mxu0 0.0
    %126 = vmatprep.subr.mxu0 0.0
    %127 = vmatpush2.msra.mxu0 0.0
    %128 = vmatprep.subr.mxu0 0.0
    %129 = vmatpush2.msra.mxu0 0.0
    %130 = vmatprep.subr.mxu0 0.0
    %131 = vmatpush2.msra.mxu0 0.0
    %132 = vmatprep.subr.mxu0 0.0
    %133 = vmatpush2.msra.mxu0 0.0
    %134 = vmatprep.subr.mxu0 0.0
    %135 = vmatpush2.msra.mxu0 0.0
    %136 = vmatprep.subr.mxu0 0.0
    %137 = vmatpush2.msra.mxu0 0.0
    %138 = vmatprep.subr.mxu0 0.0
    %139 = vmatpush2.msra.mxu0 0.0
    %140 = vmatprep.subr.mxu0 0.0
    %141 = vmatpush2.msra.mxu0 0.0
    %142 = vmatprep.subr.mxu0 0.0
    %143 = vmatpush2.msra.mxu0 0.0
    %144 = vmatprep.subr.mxu0 0.0
    %145 = vmatpush2.msra.mxu0 0.0
    %146 = vmatprep.mubr.f32.mxu0 0.0
    %147 = vmatmul.mubr.f32.gmra.mxu0 %v35
    %v148 = vpop.f32.mrf.mxu0
    %v149 = vadd.f32 0.0, %v148
    %v150 = vpop.f32.mrf.mxu0
    %151 = vmatprep.mubr.f32.mxu0 0.0
    %152 = vmatmul.mubr.f32.gmra.mxu0 %v38
    %v153 = vpop.f32.mrf.mxu0
    %v154 = vadd.f32 0.0, %v153
    %v155 = vpop.f32.mrf.mxu0
    %156 = vmatprep.mubr.f32.mxu0 0.0
    %157 = vmatmul.mubr.f32.gmra.mxu0 %v41
    %v158 = vpop.f32.mrf.mxu0
    %v159 = vadd.f32 0.0, %v158
    %v160 = vpop.f32.mrf.mxu0
    %161 = vmatprep.mubr.f32.mxu0 0.0
    %162 = vmatmul.mubr.f32.gmra.mxu0 %v44
    %v163 = vpop.f32.mrf.mxu0
    %v164 = vadd.f32 0.0, %v163
    %v165 = vpop.f32.mrf.mxu0
    %166 = vmatprep.mubr.f32.mxu0 0.0
    %167 = vmatmul.mubr.f32.gmra.mxu0 %v47
    %v168 = vpop.f32.mrf.mxu0
    %v169 = vadd.f32 0.0, %v168
    %v170 = vpop.f32.mrf.mxu0
    %171 = vmatprep.mubr.f32.mxu0 0.0
    %172 = vmatmul.mubr.f32.gmra.mxu0 %v50
    %v173 = vpop.f32.mrf.mxu0
    %v174 = vadd.f32 0.0, %v173
    %v175 = vpop.f32.mrf.mxu0
    %176 = vmatprep.mubr.f32.mxu0 0.0
    %177 = vmatmul.mubr.f32.gmra.mxu0 %v53
    %v178 = vpop.f32.mrf.mxu0
    %v179 = vadd.f32 0.0, %v178
    %v180 = vpop.f32.mrf.mxu0
    %181 = vmatprep.mubr.f32.mxu0 0.0
    %182 = vmatmul.mubr.f32.gmra.mxu0 %v56
    %v183 = vpop.f32.mrf.mxu0
    %v184 = vadd.f32 0.0, %v183
    %v185 = vpop.f32.mrf.mxu0
    %186 = vmatprep.mubr.f32.mxu0 0.0
    %187 = vmatmul.mubr.f32.gmra.mxu0 %v59
    %v188 = vpop.f32.mrf.mxu0
    %v189 = vadd.f32 0.0, %v188
    %v190 = vpop.f32.mrf.mxu0
    %191 = vmatprep.mubr.f32.mxu0 0.0
    %192 = vmatmul.mubr.f32.gmra.mxu0 %v62
    %v193 = vpop.f32.mrf.mxu0
    %v194 = vadd.f32 0.0, %v193
    %v195 = vpop.f32.mrf.mxu0
    %196 = vmatprep.mubr.f32.mxu0 0.0
    %197 = vmatmul.mubr.f32.gmra.mxu0 %v65
    %v198 = vpop.f32.mrf.mxu0
    %v199 = vadd.f32 0.0, %v198
    %v200 = vpop.f32.mrf.mxu0
    %201 = vmatprep.mubr.f32.mxu0 0.0
    %202 = vmatmul.mubr.f32.gmra.mxu0 %v68
    %v203 = vpop.f32.mrf.mxu0
    %v204 = vadd.f32 0.0, %v203
    %v205 = vpop.f32.mrf.mxu0
    %206 = vmatprep.mubr.f32.mxu0 0.0
    %207 = vmatmul.mubr.f32.gmra.mxu0 %v71
    %v208 = vpop.f32.mrf.mxu0
    %v209 = vadd.f32 0.0, %v208
    %v210 = vpop.f32.mrf.mxu0
    %211 = vmatprep.mubr.f32.mxu0 0.0
    %212 = vmatmul.mubr.f32.gmra.mxu0 %v74
    %v213 = vpop.f32.mrf.mxu0
    %v214 = vadd.f32 0.0, %v213
    %v215 = vpop.f32.mrf.mxu0
    %216 = vmatprep.mubr.f32.mxu0 0.0
    %217 = vmatmul.mubr.f32.gmra.mxu0 %v77
    %v218 = vpop.f32.mrf.mxu0
    %v219 = vadd.f32 0.0, %v218
    %v220 = vpop.f32.mrf.mxu0
    %221 = vmatprep.mubr.f32.mxu0 0.0
    %222 = vmatmul.mubr.f32.gmra.mxu0 %v80
    %v223 = vpop.f32.mrf.mxu0
    %v224 = vadd.f32 0.0, %v223
    %v225 = vpop.f32.mrf.mxu0
    %226 = vdwg.mxu0
    %v227 = vadd.f32 %v149, %v154
    %v228 = vadd.f32 %v227, %v159
    %v229 = vadd.f32 %v228, %v164
    %v230 = vadd.f32 %v229, %v169
    %v231 = vadd.f32 %v230, %v174
    %v232 = vadd.f32 %v231, %v179
    %v233 = vadd.f32 %v232, %v184
    %v234 = vadd.f32 %v233, %v189
    %v235 = vadd.f32 %v234, %v194
    %v236 = vadd.f32 %v235, %v199
    %v237 = vadd.f32 %v236, %v204
    %v238 = vadd.f32 %v237, %v209
    %v239 = vadd.f32 %v238, %v214
    %v240 = vadd.f32 %v239, %v219
    %v241 = vadd.f32 %v240, %v224
    %v242 = vrot.slane %v241, 4
    %v243 = vadd.f32 %v241, %v242
    %v244 = vrot.slane %v243, 2
    %v245 = vadd.f32 %v243, %v244
    %v246 = vrot.slane %v245, 1
    %v247 = vadd.f32 %v245, %v246
    %v248 = vmul.f32 %v149, %v149
    %v249 = vmul.f32 %v154, %v154
    %v250 = vmul.f32 %v159, %v159
    %v251 = vmul.f32 %v164, %v164
    %v252 = vmul.f32 %v169, %v169
    %v253 = vmul.f32 %v174, %v174
    %v254 = vmul.f32 %v179, %v179
    %v255 = vmul.f32 %v184, %v184
    %v256 = vmul.f32 %v189, %v189
    %v257 = vmul.f32 %v194, %v194
    %v258 = vmul.f32 %v199, %v199
    %v259 = vmul.f32 %v204, %v204
    %v260 = vmul.f32 %v209, %v209
    %v261 = vmul.f32 %v214, %v214
    %v262 = vmul.f32 %v219, %v219
    %v263 = vmul.f32 %v224, %v224
    %v264 = vadd.f32 %v248, %v249
    %v265 = vadd.f32 %v264, %v250
    %v266 = vadd.f32 %v265, %v251
    %v267 = vadd.f32 %v266, %v252
    %v268 = vadd.f32 %v267, %v253
    %v269 = vadd.f32 %v268, %v254
    %v270 = vadd.f32 %v269, %v255
    %v271 = vadd.f32 %v270, %v256
    %v272 = vadd.f32 %v271, %v257
    %v273 = vadd.f32 %v272, %v258
    %v274 = vadd.f32 %v273, %v259
    %v275 = vadd.f32 %v274, %v260
    %v276 = vadd.f32 %v275, %v261
    %v277 = vadd.f32 %v276, %v262
    %v278 = vadd.f32 %v277, %v263
    %v279 = vrot.slane %v278, 4
    %v280 = vadd.f32 %v278, %v279
    %v281 = vrot.slane %v280, 2
    %v282 = vadd.f32 %v280, %v281
    %v283 = vrot.slane %v282, 1
    %v284 = vadd.f32 %v282, %v283
    %p285 = scmp.eq.s32.totalorder 0, 0
    // Predicated region
    $region10: #{tpu_custom_call.1} parent=1 // pred_check
      %p286 = pneg %p285
    $region11: #{tpu_custom_call.1} parent=1 // pred_check_branch
      %288 = sbr.rel (%p286) target = $region13
    $region12: #{tpu_custom_call.1} parent=1 // pred_region
      %289 = vst [vmem:[#allocation2] sm:$0x1] %v247
      %290 = vst [vmem:[#allocation4] sm:$0x1] %v284
    $region13: #{tpu_custom_call.1} parent=1 // pred_fallthru
      _
    %p291 = scmp.gt.s32.totalorder 0, 0
    // Predicated region
    $region14: #{tpu_custom_call.1} parent=1 // pred_check
      %p292 = pneg %p291
    $region15: #{tpu_custom_call.1} parent=1 // pred_check_branch
      %294 = sbr.rel (%p292) target = $region17
    $region16: #{tpu_custom_call.1} parent=1 // pred_region
      %v295 = vld [vmem:[#allocation2] sm:$0x1]
      %v296 = vadd.f32 %v295, %v247
      %297 = vst [vmem:[#allocation2] sm:$0x1] %v296
      %v298 = vld [vmem:[#allocation4] sm:$0x1]
      %v299 = vadd.f32 %v298, %v284
      %300 = vst [vmem:[#allocation4] sm:$0x1] %v299
    $region17: #{tpu_custom_call.1} parent=1 // pred_fallthru
      _
    // Predicated region
    $region18: #{tpu_custom_call.1} parent=1 // pred_check
      _
    $region19: #{tpu_custom_call.1} parent=1 // pred_check_branch
      %302 = sbr.rel (0) target = $region21
    $region20: #{tpu_custom_call.1} parent=1 // pred_region
      %s304 = ssub.s32 16, 16
      %305 = vsyncadd [#allocation3], %s304
      %s307 = sshll.u32 [#allocation2], 4
      %s308 = int_to_ptr.vmem [resolvable:$true] %s307
      %310 = dma.vmem_to_hbm [thread:$0]  %s308, 16, %s2, [#allocation3]
    $region21: #{tpu_custom_call.1} parent=1 // pred_fallthru
      _
    // Predicated region
    $region22: #{tpu_custom_call.1} parent=1 // pred_check
      _
    $region23: #{tpu_custom_call.1} parent=1 // pred_check_branch
      %312 = sbr.rel (0) target = $region25
    $region24: #{tpu_custom_call.1} parent=1 // pred_region
      %s314 = ssub.s32 16, 16
      %315 = vsyncadd [#allocation5], %s314
      %s317 = sshll.u32 [#allocation4], 4
      %s318 = int_to_ptr.vmem [resolvable:$true] %s317
      %320 = dma.vmem_to_hbm [thread:$0]  %s318, 16, %s3, [#allocation5]
    $region25: #{tpu_custom_call.1} parent=1 // pred_fallthru
      _
    // Predicated region
    $region26: #{tpu_custom_call.1} parent=1 // pred_check
      _
    $region27: #{tpu_custom_call.1} parent=1 // pred_check_branch
      %322 = sbr.rel (0) target = $region29
    $region28: #{tpu_custom_call.1} parent=1 // pred_region
      %323 = dma.done [#allocation3], 16
    $region29: #{tpu_custom_call.1} parent=1 // pred_fallthru
      _
    // Predicated region
    $region30: #{tpu_custom_call.1} parent=1 // pred_check
      _
    $region31: #{tpu_custom_call.1} parent=1 // pred_check_branch
      %325 = sbr.rel (0) target = $region33
    $region32: #{tpu_custom_call.1} parent=1 // pred_region
      %326 = dma.done [#allocation5], 16
    $region33: #{tpu_custom_call.1} parent=1 // pred_fallthru
      _
    %327 = vsyncpa [#allocation3], 1
    %328 = vsyncpa [#allocation5], 1

</llo_original>
